<compile_context>
chip_gen: v7x
topology: tpu7x:2x2x1
jax: 0.10.0
libtpu: 0.0.40
codegen_flags: <defaults>
</compile_context>

<pallas_src>
import numpy as np
import jax
import jax.numpy as jnp
from jax.experimental import pallas as pl
from jax.experimental.pallas import tpu as pltpu


def _round_up(x, m):
    return (x + m - 1) // m * m


def ranker_kernel(scale_ref, q_ref, c_ref, wqt_ref, wtt_ref, lab_ref,
                  scores_ref, bce_ref):
    # q_ref: [bt, Lq_p, H]  c_ref: [bt, Lc_p, H]   (one batch tile, bf16/f32)
    # wqt_ref / wtt_ref: [P, H] f32                (resident across the grid)
    # lab_ref / scores_ref / bce_ref: [1, bt]      (lane-dense rows)

    # Sequence pooling: f32-accumulated sums over axis=1.  The 1/L mean factor
    # is dropped -- the cosine score is invariant to it (cancels in the norms),
    # which also makes the zero-padded sequence rows exactly harmless.
    q_sum = jnp.sum(q_ref[...], axis=1, dtype=jnp.float32)        # [bt, H]
    c_sum = jnp.sum(c_ref[...], axis=1, dtype=jnp.float32)        # [bt, H]

    # Projections computed directly in the transposed [P, bt] orientation
    # (MXU "A @ B^T" contraction), so every later per-example quantity is a
    # lane-dense [1, bt] row and no skinny-column relayout is needed.
    nt = (((1,), (1,)), ((), ()))
    q_proj = jax.lax.dot_general(wqt_ref[...], q_sum, nt,
                                 preferred_element_type=jnp.float32)  # [P, bt]
    c_proj = jax.lax.dot_general(wtt_ref[...], c_sum, nt,
                                 preferred_element_type=jnp.float32)  # [P, bt]

    qq = jnp.sum(q_proj * q_proj, axis=0, keepdims=True)          # [1, bt]
    cc = jnp.sum(c_proj * c_proj, axis=0, keepdims=True)          # [1, bt]
    qc = jnp.sum(q_proj * c_proj, axis=0, keepdims=True)          # [1, bt]

    # cosine * exp(logit_scale); rsqrt runs on the EUP.  The tiny eps only
    # matters for the all-zero padded batch rows (keeps them finite); for real
    # data it is far below one ulp of qq*cc and leaves the result unchanged.
    scale = scale_ref[0, 0]
    s = scale * qc * jax.lax.rsqrt(qq * cc + 1e-30)
    scores_ref[...] = s

    # Per-example BCE-with-logits terms (numerically stable form); the batch
    # mean happens in the wrapper so the batch grid axis stays fully parallel.
    y = lab_ref[...]
    bce_ref[...] = (jnp.maximum(s, 0.0) - s * y
                    + jnp.log(1.0 + jnp.exp(-jnp.abs(s))))


def _choose_tiling(B, per_ex_bytes, resident_bytes, vmem_cap, batch_tile):
    """Pick (bt, grid, b_pad).

    Multi-tile bt is a multiple of 128 so the lane-dense (1, bt) output/label
    blocks tile legally; when the batch is large enough we keep >= 2 grid
    steps so both v7x TensorCores get work.
    """
    B8 = _round_up(max(int(B), 1), 8)
    if batch_tile is not None:
        bt = _round_up(max(int(batch_tile), 1), 128)
        if bt >= B8:
            bt = B8                       # single tile covers the whole batch
    elif B8 <= 128:
        bt = B8                           # tiny batch: single tile
    else:
        budget = int(vmem_cap * 0.55)     # leave headroom for spills/scratch
        avail = max(budget - resident_bytes, per_ex_bytes)
        bt_cap = max((int(avail // max(per_ex_bytes, 1)) // 128) * 128, 128)
        bt_two = _round_up((B8 + 1) // 2, 128)   # at least 2 parallel steps
        bt = max(128, min(bt_cap, bt_two))
    g = pl.cdiv(B8, bt)
    return bt, g, g * bt


def ranker_forward(question_repr, column_repr, context_proj, table_proj,
                   logit_scale, labels=None, batch_tile=None,
                   activation_dtype=jnp.bfloat16):
    """Pallas-backed Ranker.forward. Returns (loss, scores)."""
    B, Lq, H = question_repr.shape
    _, Lc, _ = column_repr.shape
    P = context_proj.shape[1]
    have_labels = labels is not None

    # Stream the big [B, L, H] activations at bf16 width (kernel accumulates
    # the pooled sum in f32); the small resident projection weights stay f32
    # so the kernel never re-casts them per grid step.
    if activation_dtype is not None:
        question_repr = question_repr.astype(activation_dtype)
        column_repr = column_repr.astype(activation_dtype)
    act_isz = jnp.dtype(question_repr.dtype).itemsize

    # Pad sequence dims to a sublane multiple (8 for f32, 16 for bf16); the
    # zero rows are harmless because only the sequence *sum* is used.
    sub = max(8, 32 // act_isz)
    Lq_p = _round_up(Lq, sub)
    Lc_p = _round_up(Lc, sub)

    # ---- VMEM-aware batch tile (respects v7x's 64 MiB VMEM) ----
    vmem_cap = 64 * 1024 * 1024
    try:
        vmem_cap = int(getattr(pltpu.get_tpu_info(),
                               "vmem_capacity_bytes", vmem_cap))
    except Exception:
        pass
    per_ex = (2 * (Lq_p + Lc_p) * H * act_isz        # double-buffered streams
              + (2 * H + 2 * P + 16) * 4)            # f32 sums / projT / rows
    resident = 2 * 2 * H * P * 4                     # 2 weights x 2 pipeline bufs
    bt, g, b_pad = _choose_tiling(B, per_ex, resident, vmem_cap, batch_tile)
    vmem_limit = int(vmem_cap * 0.75)                # ~48 MiB v7x, ~96 MiB v5e/v6e

    # ---- pad batch (and sequence) to whole tiles; padded rows sliced off ----
    question_repr = jnp.pad(question_repr,
                            ((0, b_pad - B), (0, Lq_p - Lq), (0, 0)))
    column_repr = jnp.pad(column_repr,
                          ((0, b_pad - B), (0, Lc_p - Lc), (0, 0)))

    if labels is None:
        labels_row = jnp.zeros((1, b_pad), jnp.float32)
    else:
        lab = jnp.asarray(labels, jnp.float32).reshape(-1)
        labels_row = jnp.pad(lab, (0, b_pad - B)).reshape(1, b_pad)

    # exp(logit_scale) computed once in the wrapper; weights pre-transposed.
    scale_arr = jnp.exp(jnp.asarray(logit_scale, jnp.float32)).reshape(1, 1)
    wqt = jnp.asarray(context_proj, jnp.float32).T       # [P, H]
    wtt = jnp.asarray(table_proj, jnp.float32).T         # [P, H]

    scores_row, bce_row = pl.pallas_call(
        ranker_kernel,
        out_shape=(
            jax.ShapeDtypeStruct((1, b_pad), jnp.float32),   # per-example scores
            jax.ShapeDtypeStruct((1, b_pad), jnp.float32),   # per-example BCE terms
        ),
        grid=(g,),
        in_specs=[
            pl.BlockSpec(memory_space=pltpu.MemorySpace.SMEM),   # exp(logit_scale)
            pl.BlockSpec((bt, Lq_p, H), lambda i: (i, 0, 0)),    # question tile
            pl.BlockSpec((bt, Lc_p, H), lambda i: (i, 0, 0)),    # column tile
            pl.BlockSpec((P, H), lambda i: (0, 0)),              # context_proj^T (resident)
            pl.BlockSpec((P, H), lambda i: (0, 0)),              # table_proj^T (resident)
            pl.BlockSpec((1, bt), lambda i: (0, i)),             # labels (lane-dense)
        ],
        out_specs=(
            pl.BlockSpec((1, bt), lambda i: (0, i)),             # scores (lane-dense)
            pl.BlockSpec((1, bt), lambda i: (0, i)),             # bce terms (lane-dense)
        ),
        compiler_params=pltpu.CompilerParams(
            dimension_semantics=("parallel",),
            vmem_limit_bytes=vmem_limit),
    )(scale_arr, question_repr, column_repr, wqt, wtt, labels_row)

    scores = scores_row[0, :B]
    if have_labels:
        # BCEWithLogitsLoss(reduction='mean') == mean of per-example terms.
        loss = jnp.mean(bce_row[0, :B])
    else:
        loss = None
    return loss, scores


def ranker_reference(question_repr, column_repr, context_proj, table_proj,
                     logit_scale, labels):
    """Pure-JAX reference matching the PyTorch semantics."""
    q = jnp.mean(question_repr.astype(jnp.float32), axis=1)
    c = jnp.mean(column_repr.astype(jnp.float32), axis=1)
    q = q @ context_proj.astype(jnp.float32)
    c = c @ table_proj.astype(jnp.float32)
    q = q / jnp.linalg.norm(q, axis=-1, keepdims=True)
    c = c / jnp.linalg.norm(c, axis=-1, keepdims=True)
    scores = jnp.exp(jnp.asarray(logit_scale, jnp.float32)) * jnp.sum(q * c, axis=-1)
    y = jnp.asarray(labels, jnp.float32).reshape(-1)
    s = scores.reshape(-1)
    loss = jnp.mean(jnp.maximum(s, 0.0) - s * y
                    + jnp.log(1.0 + jnp.exp(-jnp.abs(s))))
    return loss, scores


if __name__ == "__main__":
    key = jax.random.PRNGKey(0)

    def run_case(B, Lq, Lc, H, P, batch_tile, case_key):
        k1, k2, k3, k4, k5 = jax.random.split(case_key, 5)
        # synthetic encoder outputs (stand-in for encode_context_and_table),
        # kept in bf16 -- the kernel streams them at bf16 width.
        q = jax.random.normal(k1, (B, Lq, H), jnp.float32).astype(jnp.bfloat16)
        c = jax.random.normal(k2, (B, Lc, H), jnp.float32).astype(jnp.bfloat16)
        # parameters, initialized as in Ranker.__init__ (normal, std = H**-0.5)
        wq = jax.random.normal(k3, (H, P), jnp.float32) * (H ** -0.5)
        wt = jax.random.normal(k4, (H, P), jnp.float32) * (H ** -0.5)
        logit_scale = jnp.asarray(np.log(1.0 / 0.07), jnp.float32)
        labels = (jax.random.uniform(k5, (B,)) > 0.5).astype(jnp.float32)

        loss, scores = ranker_forward(q, c, wq, wt, logit_scale, labels,
                                      batch_tile=batch_tile)
        jax.block_until_ready((loss, scores))

        ref_loss, ref_scores = ranker_reference(q, c, wq, wt, logit_scale, labels)
        np.testing.assert_allclose(np.asarray(scores), np.asarray(ref_scores),
                                   rtol=1e-3, atol=1e-3)
        np.testing.assert_allclose(np.asarray(loss), np.asarray(ref_loss),
                                   rtol=1e-3, atol=1e-3)

    k_a, k_b = jax.random.split(key)
    # single-tile path (tiny batch, full-extent lane block)
    run_case(B=12, Lq=8, Lc=16, H=32, P=64, batch_tile=None, case_key=k_a)
    # multi-tile path: 3 batch tiles of 128 -> exercises the lane-dense (1, bt)
    # output tiling, padded rows, and the parallel batch grid.
    run_case(B=260, Lq=8, Lc=8, H=32, P=64, batch_tile=128, case_key=k_b)

    print("KERNEL_OK")
</pallas_src>

<mosaic_0001>
module attributes {stable_mosaic.version = 11 : i64} {
  func.func @ranker_kernel(%arg0: i32, %arg1: memref<1x1xf32, #tpu.memory_space<smem>>, %arg2: memref<16x16x32xbf16, #tpu.memory_space<vmem>>, %arg3: memref<16x16x32xbf16, #tpu.memory_space<vmem>>, %arg4: memref<64x32xf32, #tpu.memory_space<vmem>>, %arg5: memref<64x32xf32, #tpu.memory_space<vmem>>, %arg6: memref<1x16xf32, #tpu.memory_space<vmem>>, %arg7: memref<1x16xf32, #tpu.memory_space<vmem>>, %arg8: memref<1x16xf32, #tpu.memory_space<vmem>>) attributes {dimension_semantics = [#tpu.dimension_semantics<parallel>], iteration_bounds = array<i64: 1>, scalar_prefetch = 0 : i64, scratch_operands = 0 : i64, tpu.core_type = #tpu.core_type<tc>, window_params = [{transform_indices = @transform_0, window_bounds = array<i64: 1, 1>}, {transform_indices = @transform_1, window_bounds = array<i64: 16, 16, 32>}, {transform_indices = @transform_2, window_bounds = array<i64: 16, 16, 32>}, {pipeline_mode = #tpu.pipeline_mode<synchronous>, transform_indices = @transform_3, window_bounds = array<i64: 64, 32>}, {pipeline_mode = #tpu.pipeline_mode<synchronous>, transform_indices = @transform_4, window_bounds = array<i64: 64, 32>}, {transform_indices = @transform_5, window_bounds = array<i64: 1, 16>}, {transform_indices = @transform_6, window_bounds = array<i64: 1, 16>}, {transform_indices = @transform_7, window_bounds = array<i64: 1, 16>}]} {
    %c0 = arith.constant 0 : index
    %c0_0 = arith.constant 0 : index
    %c0_1 = arith.constant 0 : index
    %0 = vector.load %arg2[%c0, %c0_0, %c0_1] : memref<16x16x32xbf16, #tpu.memory_space<vmem>>, vector<16x16x32xbf16>
    %1 = arith.extf %0 : vector<16x16x32xbf16> to vector<16x16x32xf32>
    %cst = arith.constant dense<0.000000e+00> : vector<16x32xf32>
    %2 = vector.multi_reduction <add>, %1, %cst [1] : vector<16x16x32xf32> to vector<16x32xf32>
    %c0_2 = arith.constant 0 : index
    %c0_3 = arith.constant 0 : index
    %c0_4 = arith.constant 0 : index
    %3 = vector.load %arg3[%c0_2, %c0_3, %c0_4] : memref<16x16x32xbf16, #tpu.memory_space<vmem>>, vector<16x16x32xbf16>
    %4 = arith.extf %3 : vector<16x16x32xbf16> to vector<16x16x32xf32>
    %cst_5 = arith.constant dense<0.000000e+00> : vector<16x32xf32>
    %5 = vector.multi_reduction <add>, %4, %cst_5 [1] : vector<16x16x32xf32> to vector<16x32xf32>
    %c0_6 = arith.constant 0 : index
    %c0_7 = arith.constant 0 : index
    %6 = vector.load %arg4[%c0_6, %c0_7] : memref<64x32xf32, #tpu.memory_space<vmem>>, vector<64x32xf32>
    %cst_8 = arith.constant dense<0.000000e+00> : vector<64x16xf32>
    %7 = tpu.matmul %6, %2, %cst_8 {dimension_numbers = #tpu.dot_dimension_numbers<[1], [1], [0], [0], [0, 0, 1, 0], [], []>} : vector<64x32xf32>, vector<16x32xf32>, vector<64x16xf32> -> vector<64x16xf32>
    %c0_9 = arith.constant 0 : index
    %c0_10 = arith.constant 0 : index
    %8 = vector.load %arg5[%c0_9, %c0_10] : memref<64x32xf32, #tpu.memory_space<vmem>>, vector<64x32xf32>
    %cst_11 = arith.constant dense<0.000000e+00> : vector<64x16xf32>
    %9 = tpu.matmul %8, %5, %cst_11 {dimension_numbers = #tpu.dot_dimension_numbers<[1], [1], [0], [0], [0, 0, 1, 0], [], []>} : vector<64x32xf32>, vector<16x32xf32>, vector<64x16xf32> -> vector<64x16xf32>
    %10 = arith.mulf %7, %7 : vector<64x16xf32>
    %cst_12 = arith.constant dense<0.000000e+00> : vector<16xf32>
    %11 = vector.multi_reduction <add>, %10, %cst_12 [0] : vector<64x16xf32> to vector<16xf32>
    %12 = vector.shape_cast %11 : vector<16xf32> to vector<1x16xf32>
    %13 = arith.mulf %9, %9 : vector<64x16xf32>
    %cst_13 = arith.constant dense<0.000000e+00> : vector<16xf32>
    %14 = vector.multi_reduction <add>, %13, %cst_13 [0] : vector<64x16xf32> to vector<16xf32>
    %15 = vector.shape_cast %14 : vector<16xf32> to vector<1x16xf32>
    %16 = arith.mulf %7, %9 : vector<64x16xf32>
    %cst_14 = arith.constant dense<0.000000e+00> : vector<16xf32>
    %17 = vector.multi_reduction <add>, %16, %cst_14 [0] : vector<64x16xf32> to vector<16xf32>
    %18 = vector.shape_cast %17 : vector<16xf32> to vector<1x16xf32>
    %c0_15 = arith.constant 0 : index
    %c0_16 = arith.constant 0 : index
    %19 = memref.load %arg1[%c0_15, %c0_16] : memref<1x1xf32, #tpu.memory_space<smem>>
    %20 = vector.broadcast %19 : f32 to vector<1x16xf32>
    %21 = arith.mulf %20, %18 : vector<1x16xf32>
    %22 = arith.mulf %12, %15 : vector<1x16xf32>
    %cst_17 = arith.constant 1.000000e-30 : f32
    %23 = vector.broadcast %cst_17 : f32 to vector<1x16xf32>
    %24 = arith.addf %22, %23 : vector<1x16xf32>
    %25 = math.rsqrt %24 : vector<1x16xf32>
    %26 = arith.mulf %21, %25 : vector<1x16xf32>
    %c0_18 = arith.constant 0 : index
    %c0_19 = arith.constant 0 : index
    %27 = vector.load %arg7[%c0_18, %c0_19] : memref<1x16xf32, #tpu.memory_space<vmem>>, vector<1x16xf32>
    tpu.vector_store %arg7[%c0_18, %c0_19], %26 {strides = array<i32>} : memref<1x16xf32, #tpu.memory_space<vmem>>, vector<1x16xf32>,
    %c0_20 = arith.constant 0 : index
    %c0_21 = arith.constant 0 : index
    %28 = vector.load %arg6[%c0_20, %c0_21] : memref<1x16xf32, #tpu.memory_space<vmem>>, vector<1x16xf32>
    %cst_22 = arith.constant 0.000000e+00 : f32
    %29 = vector.broadcast %cst_22 : f32 to vector<1x16xf32>
    %30 = arith.maximumf %26, %29 : vector<1x16xf32>
    %31 = arith.mulf %26, %28 : vector<1x16xf32>
    %32 = arith.subf %30, %31 : vector<1x16xf32>
    %33 = math.absf %26 : vector<1x16xf32>
    %cst_23 = arith.constant 0.000000e+00 : f32
    %34 = vector.broadcast %cst_23 : f32 to vector<1x16xf32>
    %35 = arith.subf %34, %33 : vector<1x16xf32>
    %36 = math.exp %35 : vector<1x16xf32>
    %cst_24 = arith.constant 1.000000e+00 : f32
    %37 = vector.broadcast %cst_24 : f32 to vector<1x16xf32>
    %38 = arith.addf %37, %36 : vector<1x16xf32>
    %39 = math.log %38 : vector<1x16xf32>
    %40 = arith.addf %32, %39 : vector<1x16xf32>
    %c0_25 = arith.constant 0 : index
    %c0_26 = arith.constant 0 : index
    %41 = vector.load %arg8[%c0_25, %c0_26] : memref<1x16xf32, #tpu.memory_space<vmem>>, vector<1x16xf32>
    tpu.vector_store %arg8[%c0_25, %c0_26], %40 {strides = array<i32>} : memref<1x16xf32, #tpu.memory_space<vmem>>, vector<1x16xf32>,
    return
  }
  func.func @transform_0(%arg0: i32) -> (i32, i32) {
    %c0_i32 = arith.constant 0 : i32
    %c0_i32_0 = arith.constant 0 : i32
    %c0_i32_1 = arith.constant 0 : i32
    return %c0_i32, %c0_i32_0 : i32, i32
  }
  func.func @transform_1(%arg0: i32) -> (i32, i32, i32) {
    %c0_i32 = arith.constant 0 : i32
    %c0_i32_0 = arith.constant 0 : i32
    %c0_i32_1 = arith.constant 0 : i32
    return %arg0, %c0_i32, %c0_i32_0 : i32, i32, i32
  }
  func.func @transform_2(%arg0: i32) -> (i32, i32, i32) {
    %c0_i32 = arith.constant 0 : i32
    %c0_i32_0 = arith.constant 0 : i32
    %c0_i32_1 = arith.constant 0 : i32
    return %arg0, %c0_i32, %c0_i32_0 : i32, i32, i32
  }
  func.func @transform_3(%arg0: i32) -> (i32, i32) {
    %c0_i32 = arith.constant 0 : i32
    %c0_i32_0 = arith.constant 0 : i32
    %c0_i32_1 = arith.constant 0 : i32
    return %c0_i32, %c0_i32_0 : i32, i32
  }
  func.func @transform_4(%arg0: i32) -> (i32, i32) {
    %c0_i32 = arith.constant 0 : i32
    %c0_i32_0 = arith.constant 0 : i32
    %c0_i32_1 = arith.constant 0 : i32
    return %c0_i32, %c0_i32_0 : i32, i32
  }
  func.func @transform_5(%arg0: i32) -> (i32, i32) {
    %c0_i32 = arith.constant 0 : i32
    %c0_i32_0 = arith.constant 0 : i32
    return %c0_i32, %arg0 : i32, i32
  }
  func.func @transform_6(%arg0: i32) -> (i32, i32) {
    %c0_i32 = arith.constant 0 : i32
    %c0_i32_0 = arith.constant 0 : i32
    return %c0_i32, %arg0 : i32, i32
  }
  func.func @transform_7(%arg0: i32) -> (i32, i32) {
    %c0_i32 = arith.constant 0 : i32
    %c0_i32_0 = arith.constant 0 : i32
    return %c0_i32, %arg0 : i32, i32
  }
}

</mosaic_0001>

<llo_original>
// kernel: tpu_custom_call.1
$region0: #{tpu_custom_call.1}
  #allocation0 [shape = 'u32[]', space=smem, size = 0x4, offset = 0x4, fixed_abs, tag = 'smem constant byte address 0x4 - core index']
  #allocation1 [shape = 'u32[144,128]{1,0:T(1,128)}', space=vmem, size = 0x12000, scoped, tag = 'internal scratch']
  #allocation2 [shape = 'f32[1,1]{1,0:T(1,128)S(6)}', space=smem, size = 0x200, scoped, tag = 'scoped memory for tpu_custom_call.1']
  %s0 = inlined_call_operand.<no memory space> [shape: f32[1,1], index: 0, kind: input, shape index: {}]
  %s1 = inlined_call_operand.vmem [shape: bf16[16,16,32], index: 1, kind: input, shape index: {}]
  %s2 = inlined_call_operand.hbm [shape: bf16[16,16,32], index: 2, kind: input, shape index: {}]
  %s3 = inlined_call_operand.vmem [shape: f32[64,32], index: 3, kind: input, shape index: {}]
  %s4 = inlined_call_operand.vmem [shape: f32[64,32], index: 4, kind: input, shape index: {}]
  %s5 = inlined_call_operand.vmem [shape: f32[1,16], index: 5, kind: input, shape index: {}]
  %s6 = inlined_call_operand.hbm [shape: f32[1,16], index: 6, kind: output, shape index: {0}]
  %s7 = inlined_call_operand.hbm [shape: f32[1,16], index: 7, kind: output, shape index: {1}]
  %8 = xla_tuple %s6, %s7
  %s9 = sld [smem:[#allocation0]]
  $region46: #{tpu_custom_call.1} parent=0
    _
  %s11 = ssub.s32 1, %s9
  %s12 = scalar_select 0, %s11, %s9
  %13 = sst [smem:[#allocation2]] %s0
  $region1: #{tpu_custom_call.1} parent=0
    #allocation3 [shape = 'u8[65536]{0}', space=vmem, size = 0x10000, scoped, tag = 'input window, operand 2, single buffered']
    #allocation4 [shape = 's32[1]{0}', space=sflag, size = 0x4, scoped, tag = 'scoped memory for tpu_custom_call.1']
    #allocation5 [shape = 's32[1]{0}', space=sflag, size = 0x4, scoped, tag = 'scoped memory for tpu_custom_call.1']
    #allocation6 [shape = 'u8[512]{0}', space=vmem, size = 0x400, scoped, tag = 'output window, operand 0, single buffered']
    #allocation7 [shape = 'u8[512]{0}', space=vmem, size = 0x400, scoped, tag = 'output window, operand 1, single buffered']
    #allocation8 [shape = 's32[1]{0}', space=sflag, size = 0x4, scoped, tag = 'scoped memory for tpu_custom_call.1']
    %14 = vsyncpa [#allocation4], 0
    %15 = vsyncpa [#allocation5], 0
    %16 = vsyncpa [#allocation8], 0
    // Predicated region
    $region2: #{tpu_custom_call.1} parent=1 // pred_check
      _
    $region3: #{tpu_custom_call.1} parent=1 // pred_check_branch
      %18 = sbr.rel (0) target = $region5
    $region4: #{tpu_custom_call.1} parent=1 // pred_region
      _
    $region5: #{tpu_custom_call.1} parent=1 // pred_fallthru
      _
    // Predicated region
    $region6: #{tpu_custom_call.1} parent=1 // pred_check
      _
    $region7: #{tpu_custom_call.1} parent=1 // pred_check_branch
      %20 = sbr.rel (0) target = $region9
    $region8: #{tpu_custom_call.1} parent=1 // pred_region
      _
    $region9: #{tpu_custom_call.1} parent=1 // pred_fallthru
      _
    // Predicated region
    $region10: #{tpu_custom_call.1} parent=1 // pred_check
      _
    $region11: #{tpu_custom_call.1} parent=1 // pred_check_branch
      %22 = sbr.rel (0) target = $region13
    $region12: #{tpu_custom_call.1} parent=1 // pred_region
      %s24 = ssub.s32 2048, 2048
      %25 = vsyncadd [#allocation4], %s24
      %s26 = sshll.u32 [#allocation3], 4
      %s27 = int_to_ptr.vmem [resolvable:$true] %s26
      %32 = dma.hbm_to_vmem [thread:$0]  %s2, 2048, %s27, [#allocation4], 64, 64, 4
    $region13: #{tpu_custom_call.1} parent=1 // pred_fallthru
      _
    // Predicated region
    $region14: #{tpu_custom_call.1} parent=1 // pred_check
      _
    $region15: #{tpu_custom_call.1} parent=1 // pred_check_branch
      %34 = sbr.rel (0) target = $region17
    $region16: #{tpu_custom_call.1} parent=1 // pred_region
      _
    $region17: #{tpu_custom_call.1} parent=1 // pred_fallthru
      _
    // Predicated region
    $region18: #{tpu_custom_call.1} parent=1 // pred_check
      _
    $region19: #{tpu_custom_call.1} parent=1 // pred_check_branch
      %36 = sbr.rel (0) target = $region21
    $region20: #{tpu_custom_call.1} parent=1 // pred_region
      _
    $region21: #{tpu_custom_call.1} parent=1 // pred_fallthru
      _
    // Predicated region
    $region22: #{tpu_custom_call.1} parent=1 // pred_check
      _
    $region23: #{tpu_custom_call.1} parent=1 // pred_check_branch
      %38 = sbr.rel (0) target = $region25
    $region24: #{tpu_custom_call.1} parent=1 // pred_region
      _
    $region25: #{tpu_custom_call.1} parent=1 // pred_fallthru
      _
    // Predicated region
    $region26: #{tpu_custom_call.1} parent=1 // pred_check
      _
    $region27: #{tpu_custom_call.1} parent=1 // pred_check_branch
      %40 = sbr.rel (0) target = $region29
    $region28: #{tpu_custom_call.1} parent=1 // pred_region
      %41 = dma.done [#allocation4], 2048
    $region29: #{tpu_custom_call.1} parent=1 // pred_fallthru
      _
    %v42 = vld [vmem:[%s1] sm:$0xf]
    %v43 = vld [vmem:[%s1 + $0x4] sm:$0xf]
    %v44 = vld [vmem:[%s1 + $0x8] sm:$0xf]
    %v45 = vld [vmem:[%s1 + $0xc] sm:$0xf]
    %v46 = vld [vmem:[%s1 + $0x10] sm:$0xf]
    %v47 = vld [vmem:[%s1 + $0x14] sm:$0xf]
    %v48 = vld [vmem:[%s1 + $0x18] sm:$0xf]
    %v49 = vld [vmem:[%s1 + $0x1c] sm:$0xf]
    %v50 = vld [vmem:[%s1 + $0x20] sm:$0xf]
    %v51 = vld [vmem:[%s1 + $0x24] sm:$0xf]
    %v52 = vld [vmem:[%s1 + $0x28] sm:$0xf]
    %v53 = vld [vmem:[%s1 + $0x2c] sm:$0xf]
    %v54 = vld [vmem:[%s1 + $0x30] sm:$0xf]
    %v55 = vld [vmem:[%s1 + $0x34] sm:$0xf]
    %v56 = vld [vmem:[%s1 + $0x38] sm:$0xf]
    %v57 = vld [vmem:[%s1 + $0x3c] sm:$0xf]
    %v58 = vld [vmem:[%s1 + $0x40] sm:$0xf]
    %v59 = vld [vmem:[%s1 + $0x44] sm:$0xf]
    %v60 = vld [vmem:[%s1 + $0x48] sm:$0xf]
    %v61 = vld [vmem:[%s1 + $0x4c] sm:$0xf]
    %v62 = vld [vmem:[%s1 + $0x50] sm:$0xf]
    %v63 = vld [vmem:[%s1 + $0x54] sm:$0xf]
    %v64 = vld [vmem:[%s1 + $0x58] sm:$0xf]
    %v65 = vld [vmem:[%s1 + $0x5c] sm:$0xf]
    %v66 = vld [vmem:[%s1 + $0x60] sm:$0xf]
    %v67 = vld [vmem:[%s1 + $0x64] sm:$0xf]
    %v68 = vld [vmem:[%s1 + $0x68] sm:$0xf]
    %v69 = vld [vmem:[%s1 + $0x6c] sm:$0xf]
    %v70 = vld [vmem:[%s1 + $0x70] sm:$0xf]
    %v71 = vld [vmem:[%s1 + $0x74] sm:$0xf]
    %v72 = vld [vmem:[%s1 + $0x78] sm:$0xf]
    %v73 = vld [vmem:[%s1 + $0x7c] sm:$0xf]
    %v74 = vunpack.c.l.bf16 %v42
    %v75 = vunpack.c.l.bf16 %v43
    %v76 = vunpack.c.l.bf16 %v44
    %v77 = vunpack.c.l.bf16 %v45
    %v78 = vunpack.c.l.bf16 %v46
    %v79 = vunpack.c.l.bf16 %v47
    %v80 = vunpack.c.l.bf16 %v48
    %v81 = vunpack.c.l.bf16 %v49
    %v82 = vunpack.c.l.bf16 %v50
    %v83 = vunpack.c.l.bf16 %v51
    %v84 = vunpack.c.l.bf16 %v52
    %v85 = vunpack.c.l.bf16 %v53
    %v86 = vunpack.c.l.bf16 %v54
    %v87 = vunpack.c.l.bf16 %v55
    %v88 = vunpack.c.l.bf16 %v56
    %v89 = vunpack.c.l.bf16 %v57
    %v90 = vunpack.c.l.bf16 %v58
    %v91 = vunpack.c.l.bf16 %v59
    %v92 = vunpack.c.l.bf16 %v60
    %v93 = vunpack.c.l.bf16 %v61
    %v94 = vunpack.c.l.bf16 %v62
    %v95 = vunpack.c.l.bf16 %v63
    %v96 = vunpack.c.l.bf16 %v64
    %v97 = vunpack.c.l.bf16 %v65
    %v98 = vunpack.c.l.bf16 %v66
    %v99 = vunpack.c.l.bf16 %v67
    %v100 = vunpack.c.l.bf16 %v68
    %v101 = vunpack.c.l.bf16 %v69
    %v102 = vunpack.c.l.bf16 %v70
    %v103 = vunpack.c.l.bf16 %v71
    %v104 = vunpack.c.l.bf16 %v72
    %v105 = vunpack.c.l.bf16 %v73
    %vm106 = vcmask 261120
    %v107 = vsel %vm106, %v74, 0.0
    %v108 = vsel %vm106, %v75, 0.0
    %v109 = vadd.f32 %v107, %v108
    %v110 = vrot.slane %v109, 4
    %v111 = vadd.f32 %v109, %v110
    %v112 = vrot.slane %v111, 2
    %v113 = vadd.f32 %v111, %v112
    %v114 = vrot.slane %v113, 1
    %v115 = vadd.f32 %v113, %v114
    %v116 = vsel %vm106, %v76, 0.0
    %v117 = vsel %vm106, %v77, 0.0
    %v118 = vadd.f32 %v116, %v117
    %v119 = vrot.slane %v118, 4
    %v120 = vadd.f32 %v118, %v119
    %v121 = vrot.slane %v120, 2
    %v122 = vadd.f32 %v120, %v121
    %v123 = vrot.slane %v122, 1
    %v124 = vadd.f32 %v122, %v123
    %v125 = vsel %vm106, %v78, 0.0
    %v126 = vsel %vm106, %v79, 0.0
    %v127 = vadd.f32 %v125, %v126
    %v128 = vrot.slane %v127, 4
    %v129 = vadd.f32 %v127, %v128
    %v130 = vrot.slane %v129, 2
    %v131 = vadd.f32 %v129, %v130
    %v132 = vrot.slane %v131, 1
    %v133 = vadd.f32 %v131, %v132
    %v134 = vsel %vm106, %v80, 0.0
    %v135 = vsel %vm106, %v81, 0.0
    %v136 = vadd.f32 %v134, %v135
    %v137 = vrot.slane %v136, 4
    %v138 = vadd.f32 %v136, %v137
    %v139 = vrot.slane %v138, 2
    %v140 = vadd.f32 %v138, %v139
    %v141 = vrot.slane %v140, 1
    %v142 = vadd.f32 %v140, %v141
    %v143 = vsel %vm106, %v82, 0.0
    %v144 = vsel %vm106, %v83, 0.0
    %v145 = vadd.f32 %v143, %v144
    %v146 = vrot.slane %v145, 4
    %v147 = vadd.f32 %v145, %v146
    %v148 = vrot.slane %v147, 2
    %v149 = vadd.f32 %v147, %v148
    %v150 = vrot.slane %v149, 1
    %v151 = vadd.f32 %v149, %v150
    %v152 = vsel %vm106, %v84, 0.0
    %v153 = vsel %vm106, %v85, 0.0
    %v154 = vadd.f32 %v152, %v153
    %v155 = vrot.slane %v154, 4
    %v156 = vadd.f32 %v154, %v155
    %v157 = vrot.slane %v156, 2
    %v158 = vadd.f32 %v156, %v157
    %v159 = vrot.slane %v158, 1
    %v160 = vadd.f32 %v158, %v159
    %v161 = vsel %vm106, %v86, 0.0
    %v162 = vsel %vm106, %v87, 0.0
    %v163 = vadd.f32 %v161, %v162
    %v164 = vrot.slane %v163, 4
    %v165 = vadd.f32 %v163, %v164
    %v166 = vrot.slane %v165, 2
    %v167 = vadd.f32 %v165, %v166
    %v168 = vrot.slane %v167, 1
    %v169 = vadd.f32 %v167, %v168
    %v170 = vsel %vm106, %v88, 0.0
    %v171 = vsel %vm106, %v89, 0.0
    %v172 = vadd.f32 %v170, %v171
    %v173 = vrot.slane %v172, 4
    %v174 = vadd.f32 %v172, %v173
    %v175 = vrot.slane %v174, 2
    %v176 = vadd.f32 %v174, %v175
    %v177 = vrot.slane %v176, 1
    %v178 = vadd.f32 %v176, %v177
    %v179 = vsel %vm106, %v90, 0.0
    %v180 = vsel %vm106, %v91, 0.0
    %v181 = vadd.f32 %v179, %v180
    %v182 = vrot.slane %v181, 4
    %v183 = vadd.f32 %v181, %v182
    %v184 = vrot.slane %v183, 2
    %v185 = vadd.f32 %v183, %v184
    %v186 = vrot.slane %v185, 1
    %v187 = vadd.f32 %v185, %v186
    %v188 = vsel %vm106, %v92, 0.0
    %v189 = vsel %vm106, %v93, 0.0
    %v190 = vadd.f32 %v188, %v189
    %v191 = vrot.slane %v190, 4
    %v192 = vadd.f32 %v190, %v191
    %v193 = vrot.slane %v192, 2
    %v194 = vadd.f32 %v192, %v193
    %v195 = vrot.slane %v194, 1
    %v196 = vadd.f32 %v194, %v195
    %v197 = vsel %vm106, %v94, 0.0
    %v198 = vsel %vm106, %v95, 0.0
    %v199 = vadd.f32 %v197, %v198
    %v200 = vrot.slane %v199, 4
    %v201 = vadd.f32 %v199, %v200
    %v202 = vrot.slane %v201, 2
    %v203 = vadd.f32 %v201, %v202
    %v204 = vrot.slane %v203, 1
    %v205 = vadd.f32 %v203, %v204
    %v206 = vsel %vm106, %v96, 0.0
    %v207 = vsel %vm106, %v97, 0.0
    %v208 = vadd.f32 %v206, %v207
    %v209 = vrot.slane %v208, 4
    %v210 = vadd.f32 %v208, %v209
    %v211 = vrot.slane %v210, 2
    %v212 = vadd.f32 %v210, %v211
    %v213 = vrot.slane %v212, 1
    %v214 = vadd.f32 %v212, %v213
    %v215 = vsel %vm106, %v98, 0.0
    %v216 = vsel %vm106, %v99, 0.0
    %v217 = vadd.f32 %v215, %v216
    %v218 = vrot.slane %v217, 4
    %v219 = vadd.f32 %v217, %v218
    %v220 = vrot.slane %v219, 2
    %v221 = vadd.f32 %v219, %v220
    %v222 = vrot.slane %v221, 1
    %v223 = vadd.f32 %v221, %v222
    %v224 = vsel %vm106, %v100, 0.0
    %v225 = vsel %vm106, %v101, 0.0
    %v226 = vadd.f32 %v224, %v225
    %v227 = vrot.slane %v226, 4
    %v228 = vadd.f32 %v226, %v227
    %v229 = vrot.slane %v228, 2
    %v230 = vadd.f32 %v228, %v229
    %v231 = vrot.slane %v230, 1
    %v232 = vadd.f32 %v230, %v231
    %v233 = vsel %vm106, %v102, 0.0
    %v234 = vsel %vm106, %v103, 0.0
    %v235 = vadd.f32 %v233, %v234
    %v236 = vrot.slane %v235, 4
    %v237 = vadd.f32 %v235, %v236
    %v238 = vrot.slane %v237, 2
    %v239 = vadd.f32 %v237, %v238
    %v240 = vrot.slane %v239, 1
    %v241 = vadd.f32 %v239, %v240
    %v242 = vsel %vm106, %v104, 0.0
    %v243 = vsel %vm106, %v105, 0.0
    %v244 = vadd.f32 %v242, %v243
    %v245 = vrot.slane %v244, 4
    %v246 = vadd.f32 %v244, %v245
    %v247 = vrot.slane %v246, 2
    %v248 = vadd.f32 %v246, %v247
    %v249 = vrot.slane %v248, 1
    %v250 = vadd.f32 %v248, %v249
    %v251 = vld [vmem:[#allocation3] sm:$0xf]
    %v252 = vld [vmem:[#allocation3 + $0x4] sm:$0xf]
    %v253 = vld [vmem:[#allocation3 + $0x8] sm:$0xf]
    %v254 = vld [vmem:[#allocation3 + $0xc] sm:$0xf]
    %v255 = vld [vmem:[#allocation3 + $0x10] sm:$0xf]
    %v256 = vld [vmem:[#allocation3 + $0x14] sm:$0xf]
    %v257 = vld [vmem:[#allocation3 + $0x18] sm:$0xf]
    %v258 = vld [vmem:[#allocation3 + $0x1c] sm:$0xf]
    %v259 = vld [vmem:[#allocation3 + $0x20] sm:$0xf]
    %v260 = vld [vmem:[#allocation3 + $0x24] sm:$0xf]
    %v261 = vld [vmem:[#allocation3 + $0x28] sm:$0xf]
    %v262 = vld [vmem:[#allocation3 + $0x2c] sm:$0xf]
    %v263 = vld [vmem:[#allocation3 + $0x30] sm:$0xf]
    %v264 = vld [vmem:[#allocation3 + $0x34] sm:$0xf]
    %v265 = vld [vmem:[#allocation3 + $0x38] sm:$0xf]
    %v266 = vld [vmem:[#allocation3 + $0x3c] sm:$0xf]
    %v267 = vld [vmem:[#allocation3 + $0x40] sm:$0xf]
    %v268 = vld [vmem:[#allocation3 + $0x44] sm:$0xf]
    %v269 = vld [vmem:[#allocation3 + $0x48] sm:$0xf]
    %v270 = vld [vmem:[#allocation3 + $0x4c] sm:$0xf]
    %v271 = vld [vmem:[#allocation3 + $0x50] sm:$0xf]
    %v272 = vld [vmem:[#allocation3 + $0x54] sm:$0xf]
    %v273 = vld [vmem:[#allocation3 + $0x58] sm:$0xf]
    %v274 = vld [vmem:[#allocation3 + $0x5c] sm:$0xf]
    %v275 = vld [vmem:[#allocation3 + $0x60] sm:$0xf]
    %v276 = vld [vmem:[#allocation3 + $0x64] sm:$0xf]
    %v277 = vld [vmem:[#allocation3 + $0x68] sm:$0xf]
    %v278 = vld [vmem:[#allocation3 + $0x6c] sm:$0xf]
    %v279 = vld [vmem:[#allocation3 + $0x70] sm:$0xf]
    %v280 = vld [vmem:[#allocation3 + $0x74] sm:$0xf]
    %v281 = vld [vmem:[#allocation3 + $0x78] sm:$0xf]
    %v282 = vld [vmem:[#allocation3 + $0x7c] sm:$0xf]
    %v283 = vunpack.c.l.bf16 %v251
    %v284 = vunpack.c.l.bf16 %v252
    %v285 = vunpack.c.l.bf16 %v253
    %v286 = vunpack.c.l.bf16 %v254
    %v287 = vunpack.c.l.bf16 %v255
    %v288 = vunpack.c.l.bf16 %v256
    %v289 = vunpack.c.l.bf16 %v257
    %v290 = vunpack.c.l.bf16 %v258
    %v291 = vunpack.c.l.bf16 %v259
    %v292 = vunpack.c.l.bf16 %v260
    %v293 = vunpack.c.l.bf16 %v261
    %v294 = vunpack.c.l.bf16 %v262
    %v295 = vunpack.c.l.bf16 %v263
    %v296 = vunpack.c.l.bf16 %v264
    %v297 = vunpack.c.l.bf16 %v265
    %v298 = vunpack.c.l.bf16 %v266
    %v299 = vunpack.c.l.bf16 %v267
    %v300 = vunpack.c.l.bf16 %v268
    %v301 = vunpack.c.l.bf16 %v269
    %v302 = vunpack.c.l.bf16 %v270
    %v303 = vunpack.c.l.bf16 %v271
    %v304 = vunpack.c.l.bf16 %v272
    %v305 = vunpack.c.l.bf16 %v273
    %v306 = vunpack.c.l.bf16 %v274
    %v307 = vunpack.c.l.bf16 %v275
    %v308 = vunpack.c.l.bf16 %v276
    %v309 = vunpack.c.l.bf16 %v277
    %v310 = vunpack.c.l.bf16 %v278
    %v311 = vunpack.c.l.bf16 %v279
    %v312 = vunpack.c.l.bf16 %v280
    %v313 = vunpack.c.l.bf16 %v281
    %v314 = vunpack.c.l.bf16 %v282
    %v315 = vsel %vm106, %v283, 0.0
    %v316 = vsel %vm106, %v284, 0.0
    %v317 = vadd.f32 %v315, %v316
    %v318 = vrot.slane %v317, 4
    %v319 = vadd.f32 %v317, %v318
    %v320 = vrot.slane %v319, 2
    %v321 = vadd.f32 %v319, %v320
    %v322 = vrot.slane %v321, 1
    %v323 = vadd.f32 %v321, %v322
    %v324 = vsel %vm106, %v285, 0.0
    %v325 = vsel %vm106, %v286, 0.0
    %v326 = vadd.f32 %v324, %v325
    %v327 = vrot.slane %v326, 4
    %v328 = vadd.f32 %v326, %v327
    %v329 = vrot.slane %v328, 2
    %v330 = vadd.f32 %v328, %v329
    %v331 = vrot.slane %v330, 1
    %v332 = vadd.f32 %v330, %v331
    %v333 = vsel %vm106, %v287, 0.0
    %v334 = vsel %vm106, %v288, 0.0
    %v335 = vadd.f32 %v333, %v334
    %v336 = vrot.slane %v335, 4
    %v337 = vadd.f32 %v335, %v336
    %v338 = vrot.slane %v337, 2
    %v339 = vadd.f32 %v337, %v338
    %v340 = vrot.slane %v339, 1
    %v341 = vadd.f32 %v339, %v340
    %v342 = vsel %vm106, %v289, 0.0
    %v343 = vsel %vm106, %v290, 0.0
    %v344 = vadd.f32 %v342, %v343
    %v345 = vrot.slane %v344, 4
    %v346 = vadd.f32 %v344, %v345
    %v347 = vrot.slane %v346, 2
    %v348 = vadd.f32 %v346, %v347
    %v349 = vrot.slane %v348, 1
    %v350 = vadd.f32 %v348, %v349
    %v351 = vsel %vm106, %v291, 0.0
    %v352 = vsel %vm106, %v292, 0.0
    %v353 = vadd.f32 %v351, %v352
    %v354 = vrot.slane %v353, 4
    %v355 = vadd.f32 %v353, %v354
    %v356 = vrot.slane %v355, 2
    %v357 = vadd.f32 %v355, %v356
    %v358 = vrot.slane %v357, 1
    %v359 = vadd.f32 %v357, %v358
    %v360 = vsel %vm106, %v293, 0.0
    %v361 = vsel %vm106, %v294, 0.0
    %v362 = vadd.f32 %v360, %v361
    %v363 = vrot.slane %v362, 4
    %v364 = vadd.f32 %v362, %v363
    %v365 = vrot.slane %v364, 2
    %v366 = vadd.f32 %v364, %v365
    %v367 = vrot.slane %v366, 1
    %v368 = vadd.f32 %v366, %v367
    %v369 = vsel %vm106, %v295, 0.0
    %v370 = vsel %vm106, %v296, 0.0
    %v371 = vadd.f32 %v369, %v370
    %v372 = vrot.slane %v371, 4
    %v373 = vadd.f32 %v371, %v372
    %v374 = vrot.slane %v373, 2
    %v375 = vadd.f32 %v373, %v374
    %v376 = vrot.slane %v375, 1
    %v377 = vadd.f32 %v375, %v376
    %v378 = vsel %vm106, %v297, 0.0
    %v379 = vsel %vm106, %v298, 0.0
    %v380 = vadd.f32 %v378, %v379
    %v381 = vrot.slane %v380, 4
    %v382 = vadd.f32 %v380, %v381
    %v383 = vrot.slane %v382, 2
    %v384 = vadd.f32 %v382, %v383
    %v385 = vrot.slane %v384, 1
    %v386 = vadd.f32 %v384, %v385
    %v387 = vsel %vm106, %v299, 0.0
    %v388 = vsel %vm106, %v300, 0.0
    %v389 = vadd.f32 %v387, %v388
    %v390 = vrot.slane %v389, 4
    %v391 = vadd.f32 %v389, %v390
    %v392 = vrot.slane %v391, 2
    %v393 = vadd.f32 %v391, %v392
    %v394 = vrot.slane %v393, 1
    %v395 = vadd.f32 %v393, %v394
    %v396 = vsel %vm106, %v301, 0.0
    %v397 = vsel %vm106, %v302, 0.0
    %v398 = vadd.f32 %v396, %v397
    %v399 = vrot.slane %v398, 4
    %v400 = vadd.f32 %v398, %v399
    %v401 = vrot.slane %v400, 2
    %v402 = vadd.f32 %v400, %v401
    %v403 = vrot.slane %v402, 1
    %v404 = vadd.f32 %v402, %v403
    %v405 = vsel %vm106, %v303, 0.0
    %v406 = vsel %vm106, %v304, 0.0
    %v407 = vadd.f32 %v405, %v406
    %v408 = vrot.slane %v407, 4
    %v409 = vadd.f32 %v407, %v408
    %v410 = vrot.slane %v409, 2
    %v411 = vadd.f32 %v409, %v410
    %v412 = vrot.slane %v411, 1
    %v413 = vadd.f32 %v411, %v412
    %v414 = vsel %vm106, %v305, 0.0
    %v415 = vsel %vm106, %v306, 0.0
    %v416 = vadd.f32 %v414, %v415
    %v417 = vrot.slane %v416, 4
    %v418 = vadd.f32 %v416, %v417
    %v419 = vrot.slane %v418, 2
    %v420 = vadd.f32 %v418, %v419
    %v421 = vrot.slane %v420, 1
    %v422 = vadd.f32 %v420, %v421
    %v423 = vsel %vm106, %v307, 0.0
    %v424 = vsel %vm106, %v308, 0.0
    %v425 = vadd.f32 %v423, %v424
    %v426 = vrot.slane %v425, 4
    %v427 = vadd.f32 %v425, %v426
    %v428 = vrot.slane %v427, 2
    %v429 = vadd.f32 %v427, %v428
    %v430 = vrot.slane %v429, 1
    %v431 = vadd.f32 %v429, %v430
    %v432 = vsel %vm106, %v309, 0.0
    %v433 = vsel %vm106, %v310, 0.0
    %v434 = vadd.f32 %v432, %v433
    %v435 = vrot.slane %v434, 4
    %v436 = vadd.f32 %v434, %v435
    %v437 = vrot.slane %v436, 2
    %v438 = vadd.f32 %v436, %v437
    %v439 = vrot.slane %v438, 1
    %v440 = vadd.f32 %v438, %v439
    %v441 = vsel %vm106, %v311, 0.0
    %v442 = vsel %vm106, %v312, 0.0
    %v443 = vadd.f32 %v441, %v442
    %v444 = vrot.slane %v443, 4
    %v445 = vadd.f32 %v443, %v444
    %v446 = vrot.slane %v445, 2
    %v447 = vadd.f32 %v445, %v446
    %v448 = vrot.slane %v447, 1
    %v449 = vadd.f32 %v447, %v448
    %v450 = vsel %vm106, %v313, 0.0
    %v451 = vsel %vm106, %v314, 0.0
    %v452 = vadd.f32 %v450, %v451
    %v453 = vrot.slane %v452, 4
    %v454 = vadd.f32 %v452, %v453
    %v455 = vrot.slane %v454, 2
    %v456 = vadd.f32 %v454, %v455
    %v457 = vrot.slane %v456, 1
    %v458 = vadd.f32 %v456, %v457
    %v459 = vld [vmem:[%s3] sm:$0xff]
    %v460 = vld [vmem:[%s3 + $0x8] sm:$0xff]
    %v461 = vld [vmem:[%s3 + $0x10] sm:$0xff]
    %v462 = vld [vmem:[%s3 + $0x18] sm:$0xff]
    %v463 = vld [vmem:[%s3 + $0x20] sm:$0xff]
    %v464 = vld [vmem:[%s3 + $0x28] sm:$0xff]
    %v465 = vld [vmem:[%s3 + $0x30] sm:$0xff]
    %v466 = vld [vmem:[%s3 + $0x38] sm:$0xff]
    %vm483 = vcmask 1041409
    %v484 = vsel %vm483, %v124, %v115
    %vm485 = vcmask 1042434
    %v486 = vsel %vm485, %v133, %v484
    %vm487 = vcmask 1043459
    %v488 = vsel %vm487, %v142, %v486
    %vm489 = vcmask 1044484
    %v490 = vsel %vm489, %v151, %v488
    %vm491 = vcmask 1045509
    %v492 = vsel %vm491, %v160, %v490
    %vm493 = vcmask 1046534
    %v494 = vsel %vm493, %v169, %v492
    %vm495 = vcmask 1047559
    %v496 = vsel %vm495, %v178, %v494
    %v497 = vsel %vm483, %v196, %v187
    %v498 = vsel %vm485, %v205, %v497
    %v499 = vsel %vm487, %v214, %v498
    %v500 = vsel %vm489, %v223, %v499
    %v501 = vsel %vm491, %v232, %v500
    %v502 = vsel %vm493, %v241, %v501
    %v503 = vsel %vm495, %v250, %v502
    %v505 = vsel %vm106, %v459, 0
    %v508 = vsel %vm106, %v460, 0
    %v511 = vsel %vm106, %v461, 0
    %v514 = vsel %vm106, %v462, 0
    %v517 = vsel %vm106, %v463, 0
    %v520 = vsel %vm106, %v464, 0
    %v523 = vsel %vm106, %v465, 0
    %v526 = vsel %vm106, %v466, 0
    %v528 = vsel %vm106, %v496, 0
    %v530 = vsel %vm106, %v503, 0
    %532 = vmatprep.subr.mxu0 0.0
    %533 = vmatpush1.xpose.msra.mxu0 %v528
    %534 = vmatprep.subr.mxu0 0.0
    %535 = vmatpush1.xpose.msra.mxu0 %v530
    %536 = vmatprep.subr.mxu0 0.0
    %537 = vmatpush1.xpose.msra.mxu0 0.0
    %538 = vmatprep.subr.mxu0 0.0
    %539 = vmatpush1.xpose.msra.mxu0 0.0
    %540 = vmatprep.subr.mxu0 0.0
    %541 = vmatpush1.xpose.msra.mxu0 0.0
    %542 = vmatprep.subr.mxu0 0.0
    %543 = vmatpush1.xpose.msra.mxu0 0.0
    %544 = vmatprep.subr.mxu0 0.0
    %545 = vmatpush1.xpose.msra.mxu0 0.0
    %546 = vmatprep.subr.mxu0 0.0
    %547 = vmatpush1.xpose.msra.mxu0 0.0
    %548 = vmatprep.subr.mxu0 0.0
    %549 = vmatpush1.xpose.msra.mxu0 0.0
    %550 = vmatprep.subr.mxu0 0.0
    %551 = vmatpush1.xpose.msra.mxu0 0.0
    %552 = vmatprep.subr.mxu0 0.0
    %553 = vmatpush1.xpose.msra.mxu0 0.0
    %554 = vmatprep.subr.mxu0 0.0
    %555 = vmatpush1.xpose.msra.mxu0 0.0
    %556 = vmatprep.subr.mxu0 0.0
    %557 = vmatpush1.xpose.msra.mxu0 0.0
    %558 = vmatprep.subr.mxu0 0.0
    %559 = vmatpush1.xpose.msra.mxu0 0.0
    %560 = vmatprep.subr.mxu0 0.0
    %561 = vmatpush1.xpose.msra.mxu0 0.0
    %562 = vmatprep.subr.mxu0 0.0
    %563 = vmatpush1.xpose.msra.mxu0 0.0
    %564 = vmatprep.subr.mxu0 0.0
    %565 = vmatpush1.xpose.msra.mxu0 0.0
    %566 = vmatprep.subr.mxu0 0.0
    %567 = vmatpush1.xpose.msra.mxu0 0.0
    %568 = vmatprep.subr.mxu0 0.0
    %569 = vmatpush1.xpose.msra.mxu0 0.0
    %570 = vmatprep.subr.mxu0 0.0
    %571 = vmatpush1.xpose.msra.mxu0 0.0
    %572 = vmatprep.subr.mxu0 0.0
    %573 = vmatpush1.xpose.msra.mxu0 0.0
    %574 = vmatprep.subr.mxu0 0.0
    %575 = vmatpush1.xpose.msra.mxu0 0.0
    %576 = vmatprep.subr.mxu0 0.0
    %577 = vmatpush1.xpose.msra.mxu0 0.0
    %578 = vmatprep.subr.mxu0 0.0
    %579 = vmatpush1.xpose.msra.mxu0 0.0
    %580 = vmatprep.subr.mxu0 0.0
    %581 = vmatpush1.xpose.msra.mxu0 0.0
    %582 = vmatprep.subr.mxu0 0.0
    %583 = vmatpush1.xpose.msra.mxu0 0.0
    %584 = vmatprep.subr.mxu0 0.0
    %585 = vmatpush1.xpose.msra.mxu0 0.0
    %586 = vmatprep.subr.mxu0 0.0
    %587 = vmatpush1.xpose.msra.mxu0 0.0
    %588 = vmatprep.subr.mxu0 0.0
    %589 = vmatpush1.xpose.msra.mxu0 0.0
    %590 = vmatprep.subr.mxu0 0.0
    %591 = vmatpush1.xpose.msra.mxu0 0.0
    %592 = vmatprep.subr.mxu0 0.0
    %593 = vmatpush1.xpose.msra.mxu0 0.0
    %594 = vmatprep.subr.mxu0 0.0
    %595 = vmatpush1.xpose.msra.mxu0 0.0
    %596 = vmatprep.mubr.f32.mxu0 0.0
    %597 = vmatmul.mubr.f32.gmra.mrb[0].mxu0 %v505
    %v598 = vpop.f32.mrb[0].mxu0
    %v599 = vadd.f32 0.0, %v598
    %v600 = vpop.f32.mrb[0].mxu0
    %601 = vmatprep.mubr.f32.mxu0 0.0
    %602 = vmatmul.mubr.f32.gmra.mrb[0].mxu0 %v508
    %v603 = vpop.f32.mrb[0].mxu0
    %v604 = vadd.f32 0.0, %v603
    %v605 = vpop.f32.mrb[0].mxu0
    %606 = vmatprep.mubr.f32.mxu0 0.0
    %607 = vmatmul.mubr.f32.gmra.mrb[0].mxu0 %v511
    %v608 = vpop.f32.mrb[0].mxu0
    %v609 = vadd.f32 0.0, %v608
    %v610 = vpop.f32.mrb[0].mxu0
    %611 = vmatprep.mubr.f32.mxu0 0.0
    %612 = vmatmul.mubr.f32.gmra.mrb[0].mxu0 %v514
    %v613 = vpop.f32.mrb[0].mxu0
    %v614 = vadd.f32 0.0, %v613
    %v615 = vpop.f32.mrb[0].mxu0
    %616 = vmatprep.mubr.f32.mxu0 0.0
    %617 = vmatmul.mubr.f32.gmra.mrb[0].mxu0 %v517
    %v618 = vpop.f32.mrb[0].mxu0
    %v619 = vadd.f32 0.0, %v618
    %v620 = vpop.f32.mrb[0].mxu0
    %621 = vmatprep.mubr.f32.mxu0 0.0
    %622 = vmatmul.mubr.f32.gmra.mrb[0].mxu0 %v520
    %v623 = vpop.f32.mrb[0].mxu0
    %v624 = vadd.f32 0.0, %v623
    %v625 = vpop.f32.mrb[0].mxu0
    %626 = vmatprep.mubr.f32.mxu0 0.0
    %627 = vmatmul.mubr.f32.gmra.mrb[0].mxu0 %v523
    %v628 = vpop.f32.mrb[0].mxu0
    %v629 = vadd.f32 0.0, %v628
    %v630 = vpop.f32.mrb[0].mxu0
    %631 = vmatprep.mubr.f32.mxu0 0.0
    %632 = vmatmul.mubr.f32.gmra.mrb[0].mxu0 %v526
    %v633 = vpop.f32.mrb[0].mxu0
    %v634 = vadd.f32 0.0, %v633
    %v635 = vpop.f32.mrb[0].mxu0
    %636 = vdwg.mxu0
    %v637 = vld [vmem:[%s4] sm:$0xff]
    %v638 = vld [vmem:[%s4 + $0x8] sm:$0xff]
    %v639 = vld [vmem:[%s4 + $0x10] sm:$0xff]
    %v640 = vld [vmem:[%s4 + $0x18] sm:$0xff]
    %v641 = vld [vmem:[%s4 + $0x20] sm:$0xff]
    %v642 = vld [vmem:[%s4 + $0x28] sm:$0xff]
    %v643 = vld [vmem:[%s4 + $0x30] sm:$0xff]
    %v644 = vld [vmem:[%s4 + $0x38] sm:$0xff]
    %v661 = vsel %vm483, %v332, %v323
    %v662 = vsel %vm485, %v341, %v661
    %v663 = vsel %vm487, %v350, %v662
    %v664 = vsel %vm489, %v359, %v663
    %v665 = vsel %vm491, %v368, %v664
    %v666 = vsel %vm493, %v377, %v665
    %v667 = vsel %vm495, %v386, %v666
    %v668 = vsel %vm483, %v404, %v395
    %v669 = vsel %vm485, %v413, %v668
    %v670 = vsel %vm487, %v422, %v669
    %v671 = vsel %vm489, %v431, %v670
    %v672 = vsel %vm491, %v440, %v671
    %v673 = vsel %vm493, %v449, %v672
    %v674 = vsel %vm495, %v458, %v673
    %v676 = vsel %vm106, %v637, 0
    %v679 = vsel %vm106, %v638, 0
    %v682 = vsel %vm106, %v639, 0
    %v685 = vsel %vm106, %v640, 0
    %v688 = vsel %vm106, %v641, 0
    %v691 = vsel %vm106, %v642, 0
    %v694 = vsel %vm106, %v643, 0
    %v697 = vsel %vm106, %v644, 0
    %v699 = vsel %vm106, %v667, 0
    %v701 = vsel %vm106, %v674, 0
    %703 = vmatprep.subr.mxu0 0.0
    %704 = vmatpush1.xpose.msra.mxu0 %v699
    %705 = vmatprep.subr.mxu0 0.0
    %706 = vmatpush1.xpose.msra.mxu0 %v701
    %707 = vmatprep.subr.mxu0 0.0
    %708 = vmatpush1.xpose.msra.mxu0 0.0
    %709 = vmatprep.subr.mxu0 0.0
    %710 = vmatpush1.xpose.msra.mxu0 0.0
    %711 = vmatprep.subr.mxu0 0.0
    %712 = vmatpush1.xpose.msra.mxu0 0.0
    %713 = vmatprep.subr.mxu0 0.0
    %714 = vmatpush1.xpose.msra.mxu0 0.0
    %715 = vmatprep.subr.mxu0 0.0
    %716 = vmatpush1.xpose.msra.mxu0 0.0
    %717 = vmatprep.subr.mxu0 0.0
    %718 = vmatpush1.xpose.msra.mxu0 0.0
    %719 = vmatprep.subr.mxu0 0.0
    %720 = vmatpush1.xpose.msra.mxu0 0.0
    %721 = vmatprep.subr.mxu0 0.0
    %722 = vmatpush1.xpose.msra.mxu0 0.0
    %723 = vmatprep.subr.mxu0 0.0
    %724 = vmatpush1.xpose.msra.mxu0 0.0
    %725 = vmatprep.subr.mxu0 0.0
    %726 = vmatpush1.xpose.msra.mxu0 0.0
    %727 = vmatprep.subr.mxu0 0.0
    %728 = vmatpush1.xpose.msra.mxu0 0.0
    %729 = vmatprep.subr.mxu0 0.0
    %730 = vmatpush1.xpose.msra.mxu0 0.0
    %731 = vmatprep.subr.mxu0 0.0
    %732 = vmatpush1.xpose.msra.mxu0 0.0
    %733 = vmatprep.subr.mxu0 0.0
    %734 = vmatpush1.xpose.msra.mxu0 0.0
    %735 = vmatprep.subr.mxu0 0.0
    %736 = vmatpush1.xpose.msra.mxu0 0.0
    %737 = vmatprep.subr.mxu0 0.0
    %738 = vmatpush1.xpose.msra.mxu0 0.0
    %739 = vmatprep.subr.mxu0 0.0
    %740 = vmatpush1.xpose.msra.mxu0 0.0
    %741 = vmatprep.subr.mxu0 0.0
    %742 = vmatpush1.xpose.msra.mxu0 0.0
    %743 = vmatprep.subr.mxu0 0.0
    %744 = vmatpush1.xpose.msra.mxu0 0.0
    %745 = vmatprep.subr.mxu0 0.0
    %746 = vmatpush1.xpose.msra.mxu0 0.0
    %747 = vmatprep.subr.mxu0 0.0
    %748 = vmatpush1.xpose.msra.mxu0 0.0
    %749 = vmatprep.subr.mxu0 0.0
    %750 = vmatpush1.xpose.msra.mxu0 0.0
    %751 = vmatprep.subr.mxu0 0.0
    %752 = vmatpush1.xpose.msra.mxu0 0.0
    %753 = vmatprep.subr.mxu0 0.0
    %754 = vmatpush1.xpose.msra.mxu0 0.0
    %755 = vmatprep.subr.mxu0 0.0
    %756 = vmatpush1.xpose.msra.mxu0 0.0
    %757 = vmatprep.subr.mxu0 0.0
    %758 = vmatpush1.xpose.msra.mxu0 0.0
    %759 = vmatprep.subr.mxu0 0.0
    %760 = vmatpush1.xpose.msra.mxu0 0.0
    %761 = vmatprep.subr.mxu0 0.0
    %762 = vmatpush1.xpose.msra.mxu0 0.0
    %763 = vmatprep.subr.mxu0 0.0
    %764 = vmatpush1.xpose.msra.mxu0 0.0
    %765 = vmatprep.subr.mxu0 0.0
    %766 = vmatpush1.xpose.msra.mxu0 0.0
    %767 = vmatprep.mubr.f32.mxu0 0.0
    %768 = vmatmul.mubr.f32.gmra.mrb[0].mxu0 %v676
    %v769 = vpop.f32.mrb[0].mxu0
    %v770 = vadd.f32 0.0, %v769
    %v771 = vpop.f32.mrb[0].mxu0
    %772 = vmatprep.mubr.f32.mxu0 0.0
    %773 = vmatmul.mubr.f32.gmra.mrb[0].mxu0 %v679
    %v774 = vpop.f32.mrb[0].mxu0
    %v775 = vadd.f32 0.0, %v774
    %v776 = vpop.f32.mrb[0].mxu0
    %777 = vmatprep.mubr.f32.mxu0 0.0
    %778 = vmatmul.mubr.f32.gmra.mrb[0].mxu0 %v682
    %v779 = vpop.f32.mrb[0].mxu0
    %v780 = vadd.f32 0.0, %v779
    %v781 = vpop.f32.mrb[0].mxu0
    %782 = vmatprep.mubr.f32.mxu0 0.0
    %783 = vmatmul.mubr.f32.gmra.mrb[0].mxu0 %v685
    %v784 = vpop.f32.mrb[0].mxu0
    %v785 = vadd.f32 0.0, %v784
    %v786 = vpop.f32.mrb[0].mxu0
    %787 = vmatprep.mubr.f32.mxu0 0.0
    %788 = vmatmul.mubr.f32.gmra.mrb[0].mxu0 %v688
    %v789 = vpop.f32.mrb[0].mxu0
    %v790 = vadd.f32 0.0, %v789
    %v791 = vpop.f32.mrb[0].mxu0
    %792 = vmatprep.mubr.f32.mxu0 0.0
    %793 = vmatmul.mubr.f32.gmra.mrb[0].mxu0 %v691
    %v794 = vpop.f32.mrb[0].mxu0
    %v795 = vadd.f32 0.0, %v794
    %v796 = vpop.f32.mrb[0].mxu0
    %797 = vmatprep.mubr.f32.mxu0 0.0
    %798 = vmatmul.mubr.f32.gmra.mrb[0].mxu0 %v694
    %v799 = vpop.f32.mrb[0].mxu0
    %v800 = vadd.f32 0.0, %v799
    %v801 = vpop.f32.mrb[0].mxu0
    %802 = vmatprep.mubr.f32.mxu0 0.0
    %803 = vmatmul.mubr.f32.gmra.mrb[0].mxu0 %v697
    %v804 = vpop.f32.mrb[0].mxu0
    %v805 = vadd.f32 0.0, %v804
    %v806 = vpop.f32.mrb[0].mxu0
    %807 = vdwg.mxu0
    %v808 = vmul.f32 %v599, %v599
    %v809 = vmul.f32 %v604, %v604
    %v810 = vmul.f32 %v609, %v609
    %v811 = vmul.f32 %v614, %v614
    %v812 = vmul.f32 %v619, %v619
    %v813 = vmul.f32 %v624, %v624
    %v814 = vmul.f32 %v629, %v629
    %v815 = vmul.f32 %v634, %v634
    %vm816 = vcmask 130048
    %v817 = vsel %vm816, %v808, 0.0
    %v818 = vsel %vm816, %v809, 0.0
    %v819 = vadd.f32 %v817, %v818
    %v820 = vsel %vm816, %v810, 0.0
    %v821 = vadd.f32 %v819, %v820
    %v822 = vsel %vm816, %v811, 0.0
    %v823 = vadd.f32 %v821, %v822
    %v824 = vsel %vm816, %v812, 0.0
    %v825 = vadd.f32 %v823, %v824
    %v826 = vsel %vm816, %v813, 0.0
    %v827 = vadd.f32 %v825, %v826
    %v828 = vsel %vm816, %v814, 0.0
    %v829 = vadd.f32 %v827, %v828
    %v830 = vsel %vm816, %v815, 0.0
    %v831 = vadd.f32 %v829, %v830
    %v832 = vrot.slane %v831, 4
    %v833 = vadd.f32 %v831, %v832
    %v834 = vrot.slane %v833, 2
    %v835 = vadd.f32 %v833, %v834
    %v836 = vrot.slane %v835, 1
    %v837 = vadd.f32 %v835, %v836
    %v838 = vmul.f32 %v770, %v770
    %v839 = vmul.f32 %v775, %v775
    %v840 = vmul.f32 %v780, %v780
    %v841 = vmul.f32 %v785, %v785
    %v842 = vmul.f32 %v790, %v790
    %v843 = vmul.f32 %v795, %v795
    %v844 = vmul.f32 %v800, %v800
    %v845 = vmul.f32 %v805, %v805
    %v846 = vsel %vm816, %v838, 0.0
    %v847 = vsel %vm816, %v839, 0.0
    %v848 = vadd.f32 %v846, %v847
    %v849 = vsel %vm816, %v840, 0.0
    %v850 = vadd.f32 %v848, %v849
    %v851 = vsel %vm816, %v841, 0.0
    %v852 = vadd.f32 %v850, %v851
    %v853 = vsel %vm816, %v842, 0.0
    %v854 = vadd.f32 %v852, %v853
    %v855 = vsel %vm816, %v843, 0.0
    %v856 = vadd.f32 %v854, %v855
    %v857 = vsel %vm816, %v844, 0.0
    %v858 = vadd.f32 %v856, %v857
    %v859 = vsel %vm816, %v845, 0.0
    %v860 = vadd.f32 %v858, %v859
    %v861 = vrot.slane %v860, 4
    %v862 = vadd.f32 %v860, %v861
    %v863 = vrot.slane %v862, 2
    %v864 = vadd.f32 %v862, %v863
    %v865 = vrot.slane %v864, 1
    %v866 = vadd.f32 %v864, %v865
    %v867 = vmul.f32 %v599, %v770
    %v868 = vmul.f32 %v604, %v775
    %v869 = vmul.f32 %v609, %v780
    %v870 = vmul.f32 %v614, %v785
    %v871 = vmul.f32 %v619, %v790
    %v872 = vmul.f32 %v624, %v795
    %v873 = vmul.f32 %v629, %v800
    %v874 = vmul.f32 %v634, %v805
    %v875 = vsel %vm816, %v867, 0.0
    %v876 = vsel %vm816, %v868, 0.0
    %v877 = vadd.f32 %v875, %v876
    %v878 = vsel %vm816, %v869, 0.0
    %v879 = vadd.f32 %v877, %v878
    %v880 = vsel %vm816, %v870, 0.0
    %v881 = vadd.f32 %v879, %v880
    %v882 = vsel %vm816, %v871, 0.0
    %v883 = vadd.f32 %v881, %v882
    %v884 = vsel %vm816, %v872, 0.0
    %v885 = vadd.f32 %v883, %v884
    %v886 = vsel %vm816, %v873, 0.0
    %v887 = vadd.f32 %v885, %v886
    %v888 = vsel %vm816, %v874, 0.0
    %v889 = vadd.f32 %v887, %v888
    %v890 = vrot.slane %v889, 4
    %v891 = vadd.f32 %v889, %v890
    %v892 = vrot.slane %v891, 2
    %v893 = vadd.f32 %v891, %v892
    %v894 = vrot.slane %v893, 1
    %v895 = vadd.f32 %v893, %v894
    %s896 = sld [smem:[#allocation2]]
    %v897 = vstv %s896
    %v898 = vmul.f32 %v897, %v895
    %v899 = vmul.f32 %v837, %v866
    %v900 = vadd.f32 %v899, 1e-30
    %v901 = vrsqrt.pop %v900
    %v902 = vmul.f32 %v898, %v901
    %vm903 = vcmask 122880
    %904 = vst.msk [vmem:[#allocation6] sm:$0x1] %vm903, %v902
    %v905 = vld [vmem:[%s5] sm:$0x1]
    %v906 = vmax.f32 %v902, 0.0
    %v907 = vmul.f32 %v902, %v905
    %v908 = vsub.f32 %v906, %v907
    %v909 = vand.u32 2147483647, %v902
    %v910 = vsub.f32 0.0, %v909
    %v911 = vmul.f32 %v910, 1.442695
    %v912 = vpow.pop %v911
    %v913 = vadd.f32 %v912, 1.0
    %v914 = vlog2.pop %v913
    %v915 = vmul.f32 %v914, 0.6931472
    %v916 = vadd.f32 %v908, %v915
    %917 = vst.msk [vmem:[#allocation7] sm:$0x1] %vm903, %v916
    // Predicated region
    $region30: #{tpu_custom_call.1} parent=1 // pred_check
      _
    $region31: #{tpu_custom_call.1} parent=1 // pred_check_branch
      %919 = sbr.rel (0) target = $region33
    $region32: #{tpu_custom_call.1} parent=1 // pred_region
      %s921 = ssub.s32 16, 16
      %922 = vsyncadd [#allocation5], %s921
      %s924 = sshll.u32 [#allocation6], 4
      %s925 = int_to_ptr.vmem [resolvable:$true] %s924
      %927 = dma.vmem_to_hbm [thread:$0]  %s925, 16, %s6, [#allocation5]
    $region33: #{tpu_custom_call.1} parent=1 // pred_fallthru
      _
    // Predicated region
    $region34: #{tpu_custom_call.1} parent=1 // pred_check
      _
    $region35: #{tpu_custom_call.1} parent=1 // pred_check_branch
      %929 = sbr.rel (0) target = $region37
    $region36: #{tpu_custom_call.1} parent=1 // pred_region
      %s931 = ssub.s32 16, 16
      %932 = vsyncadd [#allocation8], %s931
      %s934 = sshll.u32 [#allocation7], 4
      %s935 = int_to_ptr.vmem [resolvable:$true] %s934
      %937 = dma.vmem_to_hbm [thread:$0]  %s935, 16, %s7, [#allocation8]
    $region37: #{tpu_custom_call.1} parent=1 // pred_fallthru
      _
    // Predicated region
    $region38: #{tpu_custom_call.1} parent=1 // pred_check
      _
    $region39: #{tpu_custom_call.1} parent=1 // pred_check_branch
      %939 = sbr.rel (0) target = $region41
    $region40: #{tpu_custom_call.1} parent=1 // pred_region
      %940 = dma.done [#allocation5], 16
    $region41: #{tpu_custom_call.1} parent=1 // pred_fallthru
      _
    // Predicated region
    $region42: #{tpu_custom_call.1} parent=1 // pred_check
      _
    $region43: #{tpu_custom_call.1} parent=1 // pred_check_branch
      %942 = sbr.rel (0) target = $region45
    $region44: #{tpu_custom_call.1} parent=1 // pred_region
      %943 = dma.done [#allocation8], 16
    $region45: #{tpu_custom_call.1} parent=1 // pred_fallthru
      _
    %944 = vsyncpa [#allocation4], 1
    %945 = vsyncpa [#allocation5], 1
    %946 = vsyncpa [#allocation8], 1

</llo_original>
